<compile_context>
chip_gen: v7x
topology: tpu7x:2x2x1
jax: 0.10.0
libtpu: 0.0.40
codegen_flags: <defaults>
</compile_context>

<pallas_src>
import functools

import jax
import jax.numpy as jnp
from jax import lax
from jax.experimental import pallas as pl
from jax.experimental.pallas import tpu as pltpu


# ----------------------------- Pallas kernels ------------------------------ #

def _linear_kernel(x_ref, w_ref, b_ref, o_ref, acc_ref):
    """Tiled y = x @ w + b with an f32 VMEM accumulator over the K grid axis."""
    k = pl.program_id(2)

    @pl.when(k == 0)
    def _():
        acc_ref[...] = jnp.zeros_like(acc_ref)

    acc_ref[...] += jnp.dot(
        x_ref[...], w_ref[...], preferred_element_type=jnp.float32
    )

    @pl.when(k == pl.num_programs(2) - 1)
    def _():
        o_ref[...] = (acc_ref[...] + b_ref[...].astype(jnp.float32)).astype(
            o_ref.dtype
        )


def _mha_attention_kernel(qkv_ref, o_ref, *, num_heads, head_dim, scale):
    """All heads of softmax((q*scale) k^T) v for one batch element.

    qkv_ref block: (1, S, 3H) taken directly from the merged qkv projection.
    o_ref   block: (1, S, H)  -> heads merged in-kernel, lane-dense store.
    """
    hidden = num_heads * head_dim
    qkv = qkv_ref[0]                                   # (S, 3H)

    outs = []
    for h in range(num_heads):                          # static unroll over heads
        lo = h * head_dim
        hi = lo + head_dim
        # Scale q once (O(S*D)) instead of scaling the (S,S) score matrix.
        q = qkv[:, lo:hi] * scale                       # (S, D)
        k = qkv[:, hidden + lo:hidden + hi]             # (S, D)
        v = qkv[:, 2 * hidden + lo:2 * hidden + hi]     # (S, D)

        # QK^T contracting on the last dim of both operands (no materialized .T).
        s = lax.dot_general(
            q, k, (((1,), (1,)), ((), ())),
            preferred_element_type=jnp.float32,
        )                                               # (S, S)

        s = s - jnp.max(s, axis=-1, keepdims=True)
        p = jnp.exp(s)
        inv_l = pl.reciprocal(
            jnp.sum(p, axis=-1, keepdims=True), approx=True
        )                                               # EUP slot, not VALU divide
        o_h = jnp.dot(
            p.astype(v.dtype), v, preferred_element_type=jnp.float32
        ) * inv_l                                       # (S, D)
        outs.append(o_h)

    # Merge heads inside the kernel -> single lane-dense (S, H) store.
    o_ref[0] = jnp.concatenate(outs, axis=-1).astype(o_ref.dtype)


# ------------------------------ Wrappers ----------------------------------- #

def _tile(dim, pref):
    """Use the preferred tile if it evenly divides dim, otherwise the full dim."""
    return pref if (dim > pref and dim % pref == 0) else dim


def _linear(x2d, w, b):
    """x2d: (M, K), w: (K, N), b: (N,) -> (M, N), M/N/K-tiled with accumulator."""
    M, K = x2d.shape
    N = w.shape[1]
    tm = _tile(M, 256)
    tn = _tile(N, 256)
    tk = _tile(K, 512)
    grid = (M // tm, N // tn, K // tk)
    return pl.pallas_call(
        _linear_kernel,
        out_shape=jax.ShapeDtypeStruct((M, N), x2d.dtype),
        grid=grid,
        in_specs=[
            pl.BlockSpec((tm, tk), lambda i, j, k: (i, k)),
            pl.BlockSpec((tk, tn), lambda i, j, k: (k, j)),
            pl.BlockSpec((1, tn), lambda i, j, k: (0, j)),
        ],
        out_specs=pl.BlockSpec((tm, tn), lambda i, j, k: (i, j)),
        scratch_shapes=[pltpu.VMEM((tm, tn), jnp.float32)],
        compiler_params=pltpu.CompilerParams(
            dimension_semantics=("parallel", "parallel", "arbitrary")
        ),
    )(x2d, w, b.reshape(1, N))


def _fused_attention(qkv, num_heads, head_dim, out_dtype):
    """qkv: (B, S, 3H) -> (B, S, H); one grid step per batch, all heads fused."""
    B, S, three_h = qkv.shape
    H = num_heads * head_dim
    return pl.pallas_call(
        functools.partial(
            _mha_attention_kernel,
            num_heads=num_heads,
            head_dim=head_dim,
            scale=float(head_dim) ** -0.5,
        ),
        out_shape=jax.ShapeDtypeStruct((B, S, H), out_dtype),
        grid=(B,),
        in_specs=[pl.BlockSpec((1, S, three_h), lambda b: (b, 0, 0))],
        out_specs=pl.BlockSpec((1, S, H), lambda b: (b, 0, 0)),
        compiler_params=pltpu.CompilerParams(
            dimension_semantics=("parallel",)
        ),
    )(qkv)


def multi_head_attention(x, params, num_heads):
    """Forward pass matching MultiHeadAttention.forward (no mask, non-causal)."""
    B, S, H = x.shape
    D = H // num_heads

    # Merged qkv projection: (B*S, H) @ (H, 3H) + b -> (B, S, 3H).
    qkv = _linear(x.reshape(B * S, H), params["w_qkv"], params["b_qkv"])
    qkv = qkv.reshape(B, S, 3 * H)

    # Attention with in-kernel head split/merge -> (B, S, H), no XLA transposes.
    attn = _fused_attention(qkv, num_heads, D, x.dtype)

    # Output projection.
    out = _linear(attn.reshape(B * S, H), params["w_out"], params["b_out"])
    return out.reshape(B, S, H)


# ------------------------- Deterministic init ------------------------------ #

def init_params(key, hidden_size):
    """Xavier-uniform weights (matching nn.init.xavier_uniform_), zero biases."""
    k1, k2 = jax.random.split(key, 2)

    # qkv_proj.weight: torch shape (3H, H) -> fan_in=H, fan_out=3H
    bound_qkv = (6.0 / (hidden_size + 3 * hidden_size)) ** 0.5
    w_qkv_t = jax.random.uniform(
        k1, (3 * hidden_size, hidden_size), jnp.float32,
        minval=-bound_qkv, maxval=bound_qkv,
    )
    # out_proj.weight: torch shape (H, H)
    bound_out = (6.0 / (hidden_size + hidden_size)) ** 0.5
    w_out_t = jax.random.uniform(
        k2, (hidden_size, hidden_size), jnp.float32,
        minval=-bound_out, maxval=bound_out,
    )
    return {
        # stored transposed as (in, out) so kernels do x @ w directly
        "w_qkv": w_qkv_t.T,
        "b_qkv": jnp.zeros((3 * hidden_size,), jnp.float32),
        "w_out": w_out_t.T,
        "b_out": jnp.zeros((hidden_size,), jnp.float32),
    }


# ----------------------------- Pure-JAX reference --------------------------- #

def _reference(x, params, num_heads):
    B, S, H = x.shape
    D = H // num_heads
    qkv = x @ params["w_qkv"] + params["b_qkv"]
    q, k, v = jnp.split(qkv, 3, axis=-1)

    def heads(t):
        return t.reshape(B, S, num_heads, D).transpose(0, 2, 1, 3)

    q, k, v = heads(q), heads(k), heads(v)
    s = jnp.einsum("bnqd,bnkd->bnqk", q, k) * (float(D) ** -0.5)
    p = jax.nn.softmax(s, axis=-1)
    o = jnp.einsum("bnqk,bnkd->bnqd", p, v)
    o = o.transpose(0, 2, 1, 3).reshape(B, S, H)
    return o @ params["w_out"] + params["b_out"]


# --------------------------------- Main ------------------------------------ #

if __name__ == "__main__":
    B, S, H, NUM_HEADS = 2, 8, 32, 4

    key = jax.random.PRNGKey(0)
    k_param, k_x = jax.random.split(key)
    params = init_params(k_param, H)
    x = jax.random.normal(k_x, (B, S, H), jnp.float32)

    out = multi_head_attention(x, params, NUM_HEADS)
    jax.block_until_ready(out)

    assert out.shape == (B, S, H), out.shape
    assert jnp.all(jnp.isfinite(out))

    # Loose tolerance: softmax denominator uses the approximate EUP reciprocal.
    ref = _reference(x, params, NUM_HEADS)
    assert jnp.allclose(out, ref, atol=1e-2, rtol=1e-2), (
        float(jnp.max(jnp.abs(out - ref)))
    )

    print("KERNEL_OK")
</pallas_src>

<mosaic_0001>
module attributes {stable_mosaic.version = 11 : i64} {
  func.func @_linear_kernel(%arg0: i32, %arg1: i32, %arg2: i32, %arg3: memref<16x32xf32, #tpu.memory_space<vmem>>, %arg4: memref<32x96xf32, #tpu.memory_space<vmem>>, %arg5: memref<1x96xf32, #tpu.memory_space<vmem>>, %arg6: memref<16x96xf32, #tpu.memory_space<vmem>>, %arg7: memref<16x96xf32, #tpu.memory_space<vmem>>) attributes {dimension_semantics = [#tpu.dimension_semantics<parallel>, #tpu.dimension_semantics<parallel>, #tpu.dimension_semantics<arbitrary>], iteration_bounds = array<i64: 1, 1, 1>, scalar_prefetch = 0 : i64, scratch_operands = 1 : i64, tpu.core_type = #tpu.core_type<tc>, window_params = [{transform_indices = @transform_0, window_bounds = array<i64: 16, 32>}, {transform_indices = @transform_1, window_bounds = array<i64: 32, 96>}, {transform_indices = @transform_2, window_bounds = array<i64: 1, 96>}, {transform_indices = @transform_3, window_bounds = array<i64: 16, 96>}]} {
    %c0_i32 = arith.constant 0 : i32
    %0 = arith.cmpi eq, %arg2, %c0_i32 : i32
    %1 = arith.extui %0 : i1 to i32
    %c0_i32_0 = arith.constant 0 : i32
    %2 = arith.cmpi ne, %1, %c0_i32_0 : i32
    scf.if %2 {
      %cst_10 = arith.constant 0.000000e+00 : f32
      %12 = vector.broadcast %cst_10 : f32 to vector<16x96xf32>
      %c0_11 = arith.constant 0 : index
      %c0_12 = arith.constant 0 : index
      %13 = vector.load %arg7[%c0_11, %c0_12] : memref<16x96xf32, #tpu.memory_space<vmem>>, vector<16x96xf32>
      tpu.vector_store %arg7[%c0_11, %c0_12], %12 {strides = array<i32>} : memref<16x96xf32, #tpu.memory_space<vmem>>, vector<16x96xf32>,
    } else {
    }
    %c0 = arith.constant 0 : index
    %c0_1 = arith.constant 0 : index
    %3 = vector.load %arg7[%c0, %c0_1] : memref<16x96xf32, #tpu.memory_space<vmem>>, vector<16x96xf32>
    %c0_2 = arith.constant 0 : index
    %c0_3 = arith.constant 0 : index
    %4 = vector.load %arg3[%c0_2, %c0_3] : memref<16x32xf32, #tpu.memory_space<vmem>>, vector<16x32xf32>
    %c0_4 = arith.constant 0 : index
    %c0_5 = arith.constant 0 : index
    %5 = vector.load %arg4[%c0_4, %c0_5] : memref<32x96xf32, #tpu.memory_space<vmem>>, vector<32x96xf32>
    %cst = arith.constant dense<0.000000e+00> : vector<16x96xf32>
    %6 = tpu.matmul %4, %5, %cst {dimension_numbers = #tpu.dot_dimension_numbers<[1], [0], [0], [1], [0, 0, 1, 1], [], []>} : vector<16x32xf32>, vector<32x96xf32>, vector<16x96xf32> -> vector<16x96xf32>
    %7 = arith.addf %3, %6 : vector<16x96xf32>
    %c0_6 = arith.constant 0 : index
    %c0_7 = arith.constant 0 : index
    %8 = vector.load %arg7[%c0_6, %c0_7] : memref<16x96xf32, #tpu.memory_space<vmem>>, vector<16x96xf32>
    tpu.vector_store %arg7[%c0_6, %c0_7], %7 {strides = array<i32>} : memref<16x96xf32, #tpu.memory_space<vmem>>, vector<16x96xf32>,
    %c0_i32_8 = arith.constant 0 : i32
    %9 = arith.cmpi eq, %arg2, %c0_i32_8 : i32
    %10 = arith.extui %9 : i1 to i32
    %c0_i32_9 = arith.constant 0 : i32
    %11 = arith.cmpi ne, %10, %c0_i32_9 : i32
    scf.if %11 {
      %c0_10 = arith.constant 0 : index
      %c0_11 = arith.constant 0 : index
      %12 = vector.load %arg7[%c0_10, %c0_11] : memref<16x96xf32, #tpu.memory_space<vmem>>, vector<16x96xf32>
      %c0_12 = arith.constant 0 : index
      %c0_13 = arith.constant 0 : index
      %13 = vector.load %arg5[%c0_12, %c0_13] : memref<1x96xf32, #tpu.memory_space<vmem>>, vector<1x96xf32>
      %14 = vector.broadcast %13 : vector<1x96xf32> to vector<16x96xf32>
      %15 = arith.addf %12, %14 : vector<16x96xf32>
      %c0_14 = arith.constant 0 : index
      %c0_15 = arith.constant 0 : index
      %16 = vector.load %arg6[%c0_14, %c0_15] : memref<16x96xf32, #tpu.memory_space<vmem>>, vector<16x96xf32>
      tpu.vector_store %arg6[%c0_14, %c0_15], %15 {strides = array<i32>} : memref<16x96xf32, #tpu.memory_space<vmem>>, vector<16x96xf32>,
    } else {
    }
    return
  }
  func.func @transform_0(%arg0: i32, %arg1: i32, %arg2: i32) -> (i32, i32) {
    %c0_i32 = arith.constant 0 : i32
    return %arg0, %arg2 : i32, i32
  }
  func.func @transform_1(%arg0: i32, %arg1: i32, %arg2: i32) -> (i32, i32) {
    %c0_i32 = arith.constant 0 : i32
    return %arg2, %arg1 : i32, i32
  }
  func.func @transform_2(%arg0: i32, %arg1: i32, %arg2: i32) -> (i32, i32) {
    %c0_i32 = arith.constant 0 : i32
    %c0_i32_0 = arith.constant 0 : i32
    return %c0_i32, %arg1 : i32, i32
  }
  func.func @transform_3(%arg0: i32, %arg1: i32, %arg2: i32) -> (i32, i32) {
    %c0_i32 = arith.constant 0 : i32
    return %arg0, %arg1 : i32, i32
  }
}

</mosaic_0001>

<llo_original>
// kernel: tpu_custom_call.1
$region0: #{tpu_custom_call.1}
  #allocation0 [shape = 'u32[]', space=smem, size = 0x4, offset = 0x4, fixed_abs, tag = 'smem constant byte address 0x4 - core index']
  #allocation1 [shape = 'u32[144,128]{1,0:T(1,128)}', space=vmem, size = 0x12000, scoped, tag = 'internal scratch']
  #allocation2 [shape = 'f32[16,96]{1,0:T(8,128)}', space=vmem, size = 0x2000, scoped, tag = 'scratch operand']
  %s0 = inlined_call_operand.hbm [shape: f32[16,32], index: 0, kind: input, shape index: {}]
  %s1 = inlined_call_operand.hbm [shape: f32[32,96], index: 1, kind: input, shape index: {}]
  %s2 = inlined_call_operand.vmem [shape: f32[1,96], index: 2, kind: input, shape index: {}]
  %s3 = inlined_call_operand.hbm [shape: f32[16,96], index: 3, kind: output, shape index: {}]
  %s4 = sld [smem:[#allocation0]]
  $region38: #{tpu_custom_call.1} parent=0
    _
  %s6 = ssub.s32 1, %s4
  %s7 = scalar_select 0, %s6, %s4
  $region1: #{tpu_custom_call.1} parent=0
    #allocation3 [shape = 'u8[8192]{0}', space=vmem, size = 0x2000, scoped, tag = 'input window, operand 0, single buffered']
    #allocation4 [shape = 's32[1]{0}', space=sflag, size = 0x4, scoped, tag = 'scoped memory for tpu_custom_call.1']
    #allocation5 [shape = 's32[1]{0}', space=sflag, size = 0x4, scoped, tag = 'scoped memory for tpu_custom_call.1']
    #allocation6 [shape = 'u8[16384]{0}', space=vmem, size = 0x4000, scoped, tag = 'input window, operand 1, single buffered']
    #allocation7 [shape = 's32[1]{0}', space=sflag, size = 0x4, scoped, tag = 'scoped memory for tpu_custom_call.1']
    #allocation8 [shape = 'u8[8192]{0}', space=vmem, size = 0x2000, scoped, tag = 'output window, operand 0, single buffered']
    %8 = vsyncpa [#allocation4], 0
    %9 = vsyncpa [#allocation7], 0
    %10 = vsyncpa [#allocation5], 0
    // Predicated region
    $region2: #{tpu_custom_call.1} parent=1 // pred_check
      _
    $region3: #{tpu_custom_call.1} parent=1 // pred_check_branch
      %12 = sbr.rel (0) target = $region5
    $region4: #{tpu_custom_call.1} parent=1 // pred_region
      %s14 = ssub.s32 256, 256
      %15 = vsyncadd [#allocation4], %s14
      %s16 = sshll.u32 [#allocation3], 4
      %s17 = int_to_ptr.vmem [resolvable:$true] %s16
      %22 = dma.hbm_to_vmem [thread:$0]  %s0, 256, %s17, [#allocation4], 128, 128, 8
    $region5: #{tpu_custom_call.1} parent=1 // pred_fallthru
      _
    // Predicated region
    $region6: #{tpu_custom_call.1} parent=1 // pred_check
      _
    $region7: #{tpu_custom_call.1} parent=1 // pred_check_branch
      %24 = sbr.rel (0) target = $region9
    $region8: #{tpu_custom_call.1} parent=1 // pred_region
      %s26 = ssub.s32 512, 512
      %27 = vsyncadd [#allocation7], %s26
      %s28 = sshll.u32 [#allocation6], 4
      %s29 = int_to_ptr.vmem [resolvable:$true] %s28
      %34 = dma.hbm_to_vmem [thread:$0]  %s1, 512, %s29, [#allocation7], 128, 128, 8
    $region9: #{tpu_custom_call.1} parent=1 // pred_fallthru
      _
    // Predicated region
    $region10: #{tpu_custom_call.1} parent=1 // pred_check
      _
    $region11: #{tpu_custom_call.1} parent=1 // pred_check_branch
      %36 = sbr.rel (0) target = $region13
    $region12: #{tpu_custom_call.1} parent=1 // pred_region
      _
    $region13: #{tpu_custom_call.1} parent=1 // pred_fallthru
      _
    // Predicated region
    $region14: #{tpu_custom_call.1} parent=1 // pred_check
      _
    $region15: #{tpu_custom_call.1} parent=1 // pred_check_branch
      %38 = sbr.rel (0) target = $region17
    $region16: #{tpu_custom_call.1} parent=1 // pred_region
      %39 = dma.done [#allocation4], 256
    $region17: #{tpu_custom_call.1} parent=1 // pred_fallthru
      _
    // Predicated region
    $region18: #{tpu_custom_call.1} parent=1 // pred_check
      _
    $region19: #{tpu_custom_call.1} parent=1 // pred_check_branch
      %41 = sbr.rel (0) target = $region21
    $region20: #{tpu_custom_call.1} parent=1 // pred_region
      %42 = dma.done [#allocation7], 512
    $region21: #{tpu_custom_call.1} parent=1 // pred_fallthru
      _
    %p43 = scmp.eq.s32.totalorder 0, 0
    // Predicated region
    $region22: #{tpu_custom_call.1} parent=1 // pred_check
      %p44 = pneg %p43
    $region23: #{tpu_custom_call.1} parent=1 // pred_check_branch
      %46 = sbr.rel (%p44) target = $region25
    $region24: #{tpu_custom_call.1} parent=1 // pred_region
      %vm47 = vcmask 785408
      %48 = vst.msk [vmem:[#allocation2] sm:$0xff] %vm47, 0.0
      %49 = vst.msk [vmem:[#allocation2 + $0x8] sm:$0xff] %vm47, 0.0
    $region25: #{tpu_custom_call.1} parent=1 // pred_fallthru
      _
    %v50 = vld [vmem:[#allocation2] sm:$0xff]
    %v51 = vld [vmem:[#allocation2 + $0x8] sm:$0xff]
    %v52 = vld [vmem:[#allocation3] sm:$0xff]
    %v53 = vld [vmem:[#allocation3 + $0x8] sm:$0xff]
    %v54 = vld [vmem:[#allocation6] sm:$0xff]
    %v55 = vld [vmem:[#allocation6 + $0x8] sm:$0xff]
    %v56 = vld [vmem:[#allocation6 + $0x10] sm:$0xff]
    %v57 = vld [vmem:[#allocation6 + $0x18] sm:$0xff]
    %vm58 = vcmask 261120
    %v60 = vsel %vm58, %v52, 0
    %v63 = vsel %vm58, %v53, 0
    %65 = vmatprep.subr.mxu0 0.0
    %66 = vmatpush1.msra.mxu0 %v54
    %67 = vmatprep.subr.mxu0 0.0
    %68 = vmatpush1.msra.mxu0 %v55
    %69 = vmatprep.subr.mxu0 0.0
    %70 = vmatpush1.msra.mxu0 %v56
    %71 = vmatprep.subr.mxu0 0.0
    %72 = vmatpush1.msra.mxu0 %v57
    %73 = vmatprep.subr.mxu0 0.0
    %74 = vmatpush1.msra.mxu0 0.0
    %75 = vmatprep.subr.mxu0 0.0
    %76 = vmatpush1.msra.mxu0 0.0
    %77 = vmatprep.subr.mxu0 0.0
    %78 = vmatpush1.msra.mxu0 0.0
    %79 = vmatprep.subr.mxu0 0.0
    %80 = vmatpush1.msra.mxu0 0.0
    %81 = vmatprep.subr.mxu0 0.0
    %82 = vmatpush1.msra.mxu0 0.0
    %83 = vmatprep.subr.mxu0 0.0
    %84 = vmatpush1.msra.mxu0 0.0
    %85 = vmatprep.subr.mxu0 0.0
    %86 = vmatpush1.msra.mxu0 0.0
    %87 = vmatprep.subr.mxu0 0.0
    %88 = vmatpush1.msra.mxu0 0.0
    %89 = vmatprep.subr.mxu0 0.0
    %90 = vmatpush1.msra.mxu0 0.0
    %91 = vmatprep.subr.mxu0 0.0
    %92 = vmatpush1.msra.mxu0 0.0
    %93 = vmatprep.subr.mxu0 0.0
    %94 = vmatpush1.msra.mxu0 0.0
    %95 = vmatprep.subr.mxu0 0.0
    %96 = vmatpush1.msra.mxu0 0.0
    %97 = vmatprep.subr.mxu0 0.0
    %98 = vmatpush1.msra.mxu0 0.0
    %99 = vmatprep.subr.mxu0 0.0
    %100 = vmatpush1.msra.mxu0 0.0
    %101 = vmatprep.subr.mxu0 0.0
    %102 = vmatpush1.msra.mxu0 0.0
    %103 = vmatprep.subr.mxu0 0.0
    %104 = vmatpush1.msra.mxu0 0.0
    %105 = vmatprep.subr.mxu0 0.0
    %106 = vmatpush1.msra.mxu0 0.0
    %107 = vmatprep.subr.mxu0 0.0
    %108 = vmatpush1.msra.mxu0 0.0
    %109 = vmatprep.subr.mxu0 0.0
    %110 = vmatpush1.msra.mxu0 0.0
    %111 = vmatprep.subr.mxu0 0.0
    %112 = vmatpush1.msra.mxu0 0.0
    %113 = vmatprep.subr.mxu0 0.0
    %114 = vmatpush1.msra.mxu0 0.0
    %115 = vmatprep.subr.mxu0 0.0
    %116 = vmatpush1.msra.mxu0 0.0
    %117 = vmatprep.subr.mxu0 0.0
    %118 = vmatpush1.msra.mxu0 0.0
    %119 = vmatprep.subr.mxu0 0.0
    %120 = vmatpush1.msra.mxu0 0.0
    %121 = vmatprep.subr.mxu0 0.0
    %122 = vmatpush1.msra.mxu0 0.0
    %123 = vmatprep.subr.mxu0 0.0
    %124 = vmatpush1.msra.mxu0 0.0
    %125 = vmatprep.subr.mxu0 0.0
    %126 = vmatpush1.msra.mxu0 0.0
    %127 = vmatprep.subr.mxu0 0.0
    %128 = vmatpush1.msra.mxu0 0.0
    %129 = vmatprep.mubr.f32.mxu0 0.0
    %130 = vmatmul.mubr.f32.gmra.mrb[0].mxu0 %v60
    %v131 = vpop.f32.mrb[0].mxu0
    %v132 = vadd.f32 0.0, %v131
    %v133 = vpop.f32.mrb[0].mxu0
    %134 = vmatprep.mubr.f32.mxu0 0.0
    %135 = vmatmul.mubr.f32.gmra.mrb[0].mxu0 %v63
    %v136 = vpop.f32.mrb[0].mxu0
    %v137 = vadd.f32 0.0, %v136
    %v138 = vpop.f32.mrb[0].mxu0
    %139 = vdwg.mxu0
    %v140 = vadd.f32 %v50, %v132
    %v141 = vadd.f32 %v51, %v137
    %vm142 = vcmask 785408
    %143 = vst.msk [vmem:[#allocation2] sm:$0xff] %vm142, %v140
    %144 = vst.msk [vmem:[#allocation2 + $0x8] sm:$0xff] %vm142, %v141
    // Predicated region
    $region26: #{tpu_custom_call.1} parent=1 // pred_check
      %p145 = pneg %p43
    $region27: #{tpu_custom_call.1} parent=1 // pred_check_branch
      %147 = sbr.rel (%p145) target = $region29
    $region28: #{tpu_custom_call.1} parent=1 // pred_region
      %v148 = vld [vmem:[#allocation2] sm:$0xff]
      %v149 = vld [vmem:[#allocation2 + $0x8] sm:$0xff]
      %v150 = vld [vmem:[%s2] sm:$0x1]
      %v152 = vlaneseq
      %v153 = vshrl.u32 %v152, 7
      %v154 = vsub.s32 0, %v153
      %v155 = vrot.slane %v150, %v154
      %v157 = vadd.f32 %v148, %v155
      %v158 = vadd.f32 %v149, %v155
      %159 = vst.msk [vmem:[#allocation8] sm:$0xff] %vm142, %v157
      %160 = vst.msk [vmem:[#allocation8 + $0x8] sm:$0xff] %vm142, %v158
    $region29: #{tpu_custom_call.1} parent=1 // pred_fallthru
      _
    // Predicated region
    $region30: #{tpu_custom_call.1} parent=1 // pred_check
      _
    $region31: #{tpu_custom_call.1} parent=1 // pred_check_branch
      %162 = sbr.rel (0) target = $region33
    $region32: #{tpu_custom_call.1} parent=1 // pred_region
      %s164 = ssub.s32 256, 256
      %165 = vsyncadd [#allocation5], %s164
      %s166 = sshll.u32 [#allocation8], 4
      %s167 = int_to_ptr.vmem [resolvable:$true] %s166
      %172 = dma.vmem_to_hbm [thread:$0]  %s167, 256, %s3, [#allocation5], 128, 128, 8
    $region33: #{tpu_custom_call.1} parent=1 // pred_fallthru
      _
    // Predicated region
    $region34: #{tpu_custom_call.1} parent=1 // pred_check
      _
    $region35: #{tpu_custom_call.1} parent=1 // pred_check_branch
      %174 = sbr.rel (0) target = $region37
    $region36: #{tpu_custom_call.1} parent=1 // pred_region
      %175 = dma.done [#allocation5], 256
    $region37: #{tpu_custom_call.1} parent=1 // pred_fallthru
      _
    %176 = vsyncpa [#allocation4], 1
    %177 = vsyncpa [#allocation7], 1
    %178 = vsyncpa [#allocation5], 1

</llo_original>
